<compile_context>
chip_gen: v7x
topology: tpu7x:2x2x1
jax: 0.10.0
libtpu: 0.0.40
codegen_flags: <defaults>
</compile_context>

<pallas_src>
import jax
import jax.numpy as jnp
from jax.experimental import pallas as pl
from jax.experimental.pallas import tpu as pltpu


def _round_up(v, m):
    return ((v + m - 1) // m) * m


def _vmem_budgets():
    """Return (vmem_limit_bytes, tile_budget_bytes), TPU-generation aware.

    v7x has 64 MiB VMEM per TensorCore (vs 128 MiB on v5e/v6e); requesting
    48 MiB there leaves no headroom, so cap at 32 MiB scoped / 14 MiB tiles.
    """
    vmem_phys = 128 * 1024 * 1024
    try:
        cap = pltpu.get_tpu_info().vmem_capacity_bytes
        if cap:
            vmem_phys = int(cap)
    except Exception:
        pass  # conservative default if the query is unavailable
    if vmem_phys <= 64 * 1024 * 1024:
        return 32 * 1024 * 1024, 14 * 1024 * 1024
    return 48 * 1024 * 1024, 24 * 1024 * 1024


def _choose_tn(N, B, C, E, itemsize, tile_budget_bytes, max_tn=16384):
    """Token-tile size.

    As large as possible (bigger DMAs, fewer ~0.35 us grid-step overheads)
    while the double-buffered X (C, tn) / OUT (tn, E) blocks plus the
    (double-buffered) weight & bias blocks fit `tile_budget_bytes`, tn divides
    N (no padded tail), and there are >= 2 grid steps for the two v7x
    TensorCores whenever that is achievable.
    """
    sub = max(8, 32 // itemsize)  # sublane tile: 8 f32 / 16 bf16 / 32 int8
    # Weight (C, E) + bias (1, E) blocks, conservatively counted double-buffered.
    fixed = 2 * itemsize * (_round_up(C, sub) + sub) * _round_up(E, 128)
    # Per-token bytes of the double-buffered X (C on sublanes) and OUT (E on lanes).
    per_row = 2 * itemsize * (_round_up(C, sub) + _round_up(E, 128))
    cap = max(128, min(max_tn, (tile_budget_bytes - fixed) // per_row))

    if N <= cap and B >= 2:
        return N  # whole token row per step; batch axis already gives >= 2 steps

    start = min((cap // 128) * 128, (N // 128) * 128)
    t = start
    while t >= 128:
        # Largest 128-multiple divisor of N within the budget; for B == 1 also
        # require >= 2 token blocks so both TensorCores are used.
        if N % t == 0 and (B >= 2 or N // t >= 2):
            return t
        t -= 128
    if N <= cap:
        return N  # small / indivisible N: single whole-row block per step
    # Pathological N (no 128-multiple divisor fits): clamp to the budget and
    # accept a masked tail block instead of blowing past the VMEM limit.
    return max(128, start)


def _mlp_kernel(x_ref, w_ref, b_ref, o_ref):
    # x_ref: (C, tn) slice of the native NCHW activation (channels x tokens)
    # w_ref: (C, E) full weight;  b_ref: (1, E) bias;  o_ref: (tn, E) output
    # Contract directly over the channel (sublane) axis: transposed-lhs matmul
    # on the MXU, no in-kernel .T / XLU relayout / VMEM copy.
    acc = jax.lax.dot_general(
        x_ref[...],
        w_ref[...],
        dimension_numbers=(((0,), (0,)), ((), ())),
        preferred_element_type=jnp.float32,
    )
    o_ref[...] = (acc + b_ref[...]).astype(o_ref.dtype)


@jax.jit
def mlp_forward(x, w, b):
    """x: (B, C, H, W); w: (C, E); b: (E,). Returns (B, H*W, E)."""
    B, C, H, W = x.shape
    E = w.shape[1]
    N = H * W
    itemsize = jnp.dtype(x.dtype).itemsize

    x3 = x.reshape(B, C, N)  # free view of NCHW: no transpose, no copy
    b2 = b.reshape(1, E)

    vmem_limit, tile_budget = _vmem_budgets()
    tn = _choose_tn(N, B, C, E, itemsize, tile_budget)
    grid = (B, pl.cdiv(N, tn))

    cost = pl.CostEstimate(
        flops=int(2 * B * N * C * E),
        transcendentals=0,
        bytes_accessed=int(itemsize * (B * C * N + C * E + E + B * N * E)),
    )

    out = pl.pallas_call(
        _mlp_kernel,
        out_shape=jax.ShapeDtypeStruct((B, N, E), x.dtype),
        grid_spec=pltpu.PrefetchScalarGridSpec(
            num_scalar_prefetch=0,
            grid=grid,
            in_specs=[
                pl.BlockSpec((None, C, tn), lambda bi, j: (bi, 0, j)),  # X tile (C, tn)
                pl.BlockSpec((C, E), lambda bi, j: (0, 0)),             # full weight
                pl.BlockSpec((1, E), lambda bi, j: (0, 0)),             # bias
            ],
            out_specs=pl.BlockSpec((None, tn, E), lambda bi, j: (bi, j, 0)),
        ),
        compiler_params=pltpu.CompilerParams(
            dimension_semantics=("parallel", "parallel"),
            vmem_limit_bytes=vmem_limit,
        ),
        cost_estimate=cost,
    )(x3, w, b2)

    return out


def init_mlp_params(key, input_dim, embed_dim, dtype=jnp.float32):
    """Deterministic init mimicking nn.Linear default (uniform +-1/sqrt(fan_in))."""
    kw, kb = jax.random.split(key)
    bound = 1.0 / (input_dim ** 0.5)
    # PyTorch stores weight as (E, C); we keep the transposed (C, E) layout so
    # the kernel computes x @ W directly (equivalent to x @ weight.T).
    w = jax.random.uniform(kw, (input_dim, embed_dim), dtype, -bound, bound)
    b = jax.random.uniform(kb, (embed_dim,), dtype, -bound, bound)
    return w, b


if __name__ == "__main__":
    key = jax.random.PRNGKey(0)
    k_x, k_p = jax.random.split(key)

    # Small shapes consistent with the module: input_dim = C = 32, embed_dim = 64.
    B, C, H, W = 2, 32, 16, 16
    E = 64

    x = jax.random.normal(k_x, (B, C, H, W), jnp.float32)
    w, b = init_mlp_params(k_p, C, E)

    out = mlp_forward(x, w, b)
    out = jax.block_until_ready(out)

    # Reference check in plain JAX (same math as the PyTorch forward).
    ref = x.reshape(B, C, H * W).transpose(0, 2, 1) @ w + b
    assert out.shape == (B, H * W, E), out.shape
    err = float(jnp.max(jnp.abs(out - ref)))
    assert jnp.allclose(out, ref, atol=1e-4, rtol=1e-4), err

    print("KERNEL_OK")
</pallas_src>

<mosaic_0001>
module attributes {stable_mosaic.version = 11 : i64} {
  func.func @_mlp_kernel(%arg0: i32, %arg1: i32, %arg2: memref<1x32x256xf32, #tpu.memory_space<vmem>>, %arg3: memref<32x64xf32, #tpu.memory_space<vmem>>, %arg4: memref<1x64xf32, #tpu.memory_space<vmem>>, %arg5: memref<1x256x64xf32, #tpu.memory_space<vmem>>) attributes {dimension_semantics = [#tpu.dimension_semantics<parallel>, #tpu.dimension_semantics<parallel>], iteration_bounds = array<i64: 2, 1>, scalar_prefetch = 0 : i64, scratch_operands = 0 : i64, tpu.core_type = #tpu.core_type<tc>, window_params = [{transform_indices = @transform_0, window_bounds = array<i64: 1, 32, 256>}, {pipeline_mode = #tpu.pipeline_mode<synchronous>, transform_indices = @transform_1, window_bounds = array<i64: 32, 64>}, {pipeline_mode = #tpu.pipeline_mode<synchronous>, transform_indices = @transform_2, window_bounds = array<i64: 1, 64>}, {transform_indices = @transform_3, window_bounds = array<i64: 1, 256, 64>}]} {
    %c0 = arith.constant 0 : index
    %c0_0 = arith.constant 0 : index
    %c0_1 = arith.constant 0 : index
    %0 = vector.load %arg2[%c0, %c0_0, %c0_1] : memref<1x32x256xf32, #tpu.memory_space<vmem>>, vector<1x32x256xf32>
    %1 = vector.shape_cast %0 : vector<1x32x256xf32> to vector<32x256xf32>
    %c0_2 = arith.constant 0 : index
    %c0_3 = arith.constant 0 : index
    %2 = vector.load %arg3[%c0_2, %c0_3] : memref<32x64xf32, #tpu.memory_space<vmem>>, vector<32x64xf32>
    %cst = arith.constant dense<0.000000e+00> : vector<256x64xf32>
    %3 = tpu.matmul %1, %2, %cst {dimension_numbers = #tpu.dot_dimension_numbers<[0], [0], [1], [1], [0, 1, 1, 1], [], []>} : vector<32x256xf32>, vector<32x64xf32>, vector<256x64xf32> -> vector<256x64xf32>
    %c0_4 = arith.constant 0 : index
    %c0_5 = arith.constant 0 : index
    %4 = vector.load %arg4[%c0_4, %c0_5] : memref<1x64xf32, #tpu.memory_space<vmem>>, vector<1x64xf32>
    %5 = vector.broadcast %4 : vector<1x64xf32> to vector<256x64xf32>
    %6 = arith.addf %3, %5 : vector<256x64xf32>
    %c0_6 = arith.constant 0 : index
    %c0_7 = arith.constant 0 : index
    %c0_8 = arith.constant 0 : index
    %7 = vector.load %arg5[%c0_6, %c0_7, %c0_8] : memref<1x256x64xf32, #tpu.memory_space<vmem>>, vector<1x256x64xf32>
    %8 = vector.shape_cast %7 : vector<1x256x64xf32> to vector<256x64xf32>
    %9 = vector.shape_cast %6 : vector<256x64xf32> to vector<1x256x64xf32>
    tpu.vector_store %arg5[%c0_6, %c0_7, %c0_8], %9 {strides = array<i32>} : memref<1x256x64xf32, #tpu.memory_space<vmem>>, vector<1x256x64xf32>,
    return
  }
  func.func @transform_0(%arg0: i32, %arg1: i32) -> (i32, i32, i32) {
    %c0_i32 = arith.constant 0 : i32
    %c0_i32_0 = arith.constant 0 : i32
    return %arg0, %c0_i32, %arg1 : i32, i32, i32
  }
  func.func @transform_1(%arg0: i32, %arg1: i32) -> (i32, i32) {
    %c0_i32 = arith.constant 0 : i32
    %c0_i32_0 = arith.constant 0 : i32
    %c0_i32_1 = arith.constant 0 : i32
    return %c0_i32, %c0_i32_0 : i32, i32
  }
  func.func @transform_2(%arg0: i32, %arg1: i32) -> (i32, i32) {
    %c0_i32 = arith.constant 0 : i32
    %c0_i32_0 = arith.constant 0 : i32
    %c0_i32_1 = arith.constant 0 : i32
    return %c0_i32, %c0_i32_0 : i32, i32
  }
  func.func @transform_3(%arg0: i32, %arg1: i32) -> (i32, i32, i32) {
    %c0_i32 = arith.constant 0 : i32
    %c0_i32_0 = arith.constant 0 : i32
    return %arg0, %arg1, %c0_i32 : i32, i32, i32
  }
}

</mosaic_0001>

<llo_original>
// kernel: mlp_forward.1
$region0: #{mlp_forward.1}
  #allocation0 [shape = 'u32[]', space=smem, size = 0x4, offset = 0x4, fixed_abs, tag = 'smem constant byte address 0x4 - core index']
  #allocation1 [shape = 'u32[144,128]{1,0:T(1,128)}', space=vmem, size = 0x12000, scoped, tag = 'internal scratch']
  %s0 = inlined_call_operand.vmem [shape: f32[2,32,256], index: 0, kind: input, shape index: {}]
  %s1 = inlined_call_operand.vmem [shape: f32[32,64], index: 1, kind: input, shape index: {}]
  %s2 = inlined_call_operand.vmem [shape: f32[1,64], index: 2, kind: input, shape index: {}]
  %s3 = inlined_call_operand.vmem [shape: f32[2,256,64], index: 3, kind: output, shape index: {}]
  %s4 = sld [smem:[#allocation0]]
  $region45: #{mlp_forward.1} parent=0
    _
  %s6 = ssub.s32 1, %s4
  %s7 = scalar_select 0, %s6, %s4
  loop: start=0, step=1, limit=4
  $region2: #{mlp_forward.1} parent=0 // loop_pre_header
    _
  $region3: #{mlp_forward.1} parent=0 // loop_header
    %s9 = sphi 0, %s13
    %p10 = scmp.ge.s32.totalorder %s9, 4
    %s16 = sphi 0, %s28
    %s17 = sphi 0, %s24
    %s18 = sphi 0, %s16
    %s19 = sphi 0, %s17
    %s20 = sphi 0, %s18
    %s21 = sphi 0, %s19
    %s33 = sphi 0, %s35
    %s36 = sphi 0, %s33
    %s37 = sphi 0, %s36
    %s53 = sphi 0, %s37
    %s57 = sphi 0, %s57
    %s59 = sphi 0, %s57
    %s60 = sphi 0, %s59
    %s74 = sphi 0, %s60
    %s78 = sphi 0, %s78
    %s80 = sphi 0, %s78
    %s81 = sphi 0, %s80
    %s95 = sphi 0, %s81
    %s103 = sphi 0, %s105
    %s106 = sphi 0, %s103
    %s107 = sphi 0, %s106
    %s123 = sphi 0, %s107
  $region4: #{mlp_forward.1} parent=0 // loop_header_branch
    %12 = sbr.rel (%p10) target = $region8
  $region5: #{mlp_forward.1} parent=0 // loop_body
    %s14 = ssub.s32 %s9, 1
    %s15 = ssub.s32 %s9, 2
    %s22 = sadd.s32 1, %s17
    %p23 = scmp.ge.s32.totalorder %s22, 1
    %s24 = scalar_select %p23, 0, %s22
    %s25 = sadd.s32 1, %s16
    %s26 = scalar_select %p23, %s25, %s16
    %p27 = scmp.ge.s32.totalorder %s26, 2
    %s28 = scalar_select %p27, 0, %s26
    %s29 = ssub.s32 %s16, %s28
    %s30 = ssub.s32 %s17, %s24
    %s31 = sor.u32 %s29, %s30
    %p32 = scmp.eq.s32.totalorder %s31, 0
    %s34 = sadd.s32 %s33, 1
    %s35 = scalar_select %p32, %s33, %s34
    %p38 = pneg %p32
    %p39 = scmp.eq.s32.totalorder %s9, 1
    %p40 = por %p38, %p39
    %p41 = scmp.ne.s32.totalorder %s33, %s36
    %p42 = scmp.eq.s32.totalorder %s9, 0
    %p43 = por %p41, %p42
    %p44 = scmp.ne.s32.totalorder %s33, %s36
    %p45 = scmp.eq.s32.totalorder %s14, 1
    %p46 = por %p44, %p45
    %p47 = scmp.ne.s32.totalorder %s36, %s37
    %p48 = scmp.eq.s32.totalorder %s14, 0
    %p49 = por %p47, %p48
    %p50 = scmp.ne.s32.totalorder %s36, %s37
    %p51 = scmp.eq.s32.totalorder %s15, 1
    %p52 = por %p50, %p51
    %p54 = scmp.ne.s32.totalorder %s37, %s53
    %p55 = scmp.eq.s32.totalorder %s15, 0
    %p56 = por %p54, %p55
    %s58 = sadd.s32 %s57, 1
    %p61 = scmp.eq.s32.totalorder %s9, 1
    %p62 = scmp.ne.s32.totalorder %s57, %s59
    %p63 = scmp.eq.s32.totalorder %s9, 0
    %p64 = por %p62, %p63
    %p65 = scmp.ne.s32.totalorder %s57, %s59
    %p66 = scmp.eq.s32.totalorder %s14, 1
    %p67 = por %p65, %p66
    %p68 = scmp.ne.s32.totalorder %s59, %s60
    %p69 = scmp.eq.s32.totalorder %s14, 0
    %p70 = por %p68, %p69
    %p71 = scmp.ne.s32.totalorder %s59, %s60
    %p72 = scmp.eq.s32.totalorder %s15, 1
    %p73 = por %p71, %p72
    %p75 = scmp.ne.s32.totalorder %s60, %s74
    %p76 = scmp.eq.s32.totalorder %s15, 0
    %p77 = por %p75, %p76
    %s79 = sadd.s32 %s78, 1
    %p82 = scmp.eq.s32.totalorder %s9, 1
    %p83 = scmp.ne.s32.totalorder %s78, %s80
    %p84 = scmp.eq.s32.totalorder %s9, 0
    %p85 = por %p83, %p84
    %p86 = scmp.ne.s32.totalorder %s78, %s80
    %p87 = scmp.eq.s32.totalorder %s14, 1
    %p88 = por %p86, %p87
    %p89 = scmp.ne.s32.totalorder %s80, %s81
    %p90 = scmp.eq.s32.totalorder %s14, 0
    %p91 = por %p89, %p90
    %p92 = scmp.ne.s32.totalorder %s80, %s81
    %p93 = scmp.eq.s32.totalorder %s15, 1
    %p94 = por %p92, %p93
    %p96 = scmp.ne.s32.totalorder %s81, %s95
    %p97 = scmp.eq.s32.totalorder %s15, 0
    %p98 = por %p96, %p97
    %s99 = ssub.s32 %s16, %s28
    %s100 = ssub.s32 %s17, %s24
    %s101 = sor.u32 %s99, %s100
    %p102 = scmp.eq.s32.totalorder %s101, 0
    %s104 = sadd.s32 %s103, 1
    %s105 = scalar_select %p102, %s103, %s104
    %p108 = pneg %p102
    %p109 = scmp.eq.s32.totalorder %s9, 1
    %p110 = por %p108, %p109
    %p111 = scmp.ne.s32.totalorder %s103, %s106
    %p112 = scmp.eq.s32.totalorder %s9, 0
    %p113 = por %p111, %p112
    %p114 = scmp.ne.s32.totalorder %s103, %s106
    %p115 = scmp.eq.s32.totalorder %s14, 1
    %p116 = por %p114, %p115
    %p117 = scmp.ne.s32.totalorder %s106, %s107
    %p118 = scmp.eq.s32.totalorder %s14, 0
    %p119 = por %p117, %p118
    %p120 = scmp.ne.s32.totalorder %s106, %s107
    %p121 = scmp.eq.s32.totalorder %s15, 1
    %p122 = por %p120, %p121
    %p124 = scmp.ne.s32.totalorder %s107, %s123
    %p125 = scmp.eq.s32.totalorder %s15, 0
    %p126 = por %p124, %p125
    %p127 = scmp.le.s32.totalorder 1, %s9
    %p128 = scmp.lt.s32.totalorder %s9, 3
    %p129 = pnand %p127, %p128
    %p130 = pneg %p129
    // Predicated region
    $region9: #{mlp_forward.1} parent=5 // pred_check
      _
    $region10: #{mlp_forward.1} parent=5 // pred_check_branch
      %132 = sbr.rel (%p129) target = $region12
    $region11: #{mlp_forward.1} parent=5 // pred_region
      %s133 = ssub.s32 %s9, 1
      // Predicated region
      $region13: #{mlp_forward.1} parent=11 // pred_check
        %p134 = pneg %p70
      $region14: #{mlp_forward.1} parent=11 // pred_check_branch
        %136 = sbr.rel (%p134) target = $region16
      $region15: #{mlp_forward.1} parent=11 // pred_region
        _
      $region16: #{mlp_forward.1} parent=11 // pred_fallthru
        _
      // Predicated region
      $region17: #{mlp_forward.1} parent=11 // pred_check
        %p137 = pneg %p91
      $region18: #{mlp_forward.1} parent=11 // pred_check_branch
        %139 = sbr.rel (%p137) target = $region20
      $region19: #{mlp_forward.1} parent=11 // pred_region
        _
      $region20: #{mlp_forward.1} parent=11 // pred_fallthru
        _
    $region12: #{mlp_forward.1} parent=5 // pred_fallthru
      _
    %p140 = scmp.lt.s32.totalorder %s9, 2
    // Predicated region
    $region21: #{mlp_forward.1} parent=5 // pred_check
      %p141 = pneg %p140
    $region22: #{mlp_forward.1} parent=5 // pred_check_branch
      %143 = sbr.rel (%p141) target = $region24
    $region23: #{mlp_forward.1} parent=5 // pred_region
      // Predicated region
      $region25: #{mlp_forward.1} parent=23 // pred_check
        %p144 = pneg %p43
      $region26: #{mlp_forward.1} parent=23 // pred_check_branch
        %146 = sbr.rel (%p144) target = $region28
      $region27: #{mlp_forward.1} parent=23 // pred_region
        %s147 = smul.u32 2, %s17
        %p148 = scmp.lt.s32.totalorder %s16, 1
        %s149 = scalar_select %p148, %s16, 1
        %p150 = scmp.lt.s32.totalorder %s147, 1
        %s151 = scalar_select %p150, %s147, 1
        %s152 = smul.addr %s149, 8
        %s153 = sadd.s32 %s151, %s152
        %s154 = smul.addr %s153, 8
        %s155 = scalar_lea.vmem %s0, %s154
        %s156 = smul.u32 2, %s17
      $region28: #{mlp_forward.1} parent=23 // pred_fallthru
        _
    $region24: #{mlp_forward.1} parent=5 // pred_fallthru
      _
    %p157 = scmp.le.s32.totalorder 1, %s9
    %p158 = scmp.lt.s32.totalorder %s9, 3
    %p159 = pnand %p157, %p158
    %p160 = pneg %p159
    // Predicated region
    $region29: #{mlp_forward.1} parent=5 // pred_check
      _
    $region30: #{mlp_forward.1} parent=5 // pred_check_branch
      %162 = sbr.rel (%p159) target = $region32
    $region31: #{mlp_forward.1} parent=5 // pred_region
      %s163 = ssub.s32 %s9, 1
      %s164 = smul.u32 2, %s19
      %p165 = scmp.lt.s32.totalorder %s18, 1
      %s166 = scalar_select %p165, %s18, 1
      %p167 = scmp.lt.s32.totalorder %s164, 1
      %s168 = scalar_select %p167, %s164, 1
      %s169 = smul.addr %s166, 8
      %s170 = sadd.s32 %s168, %s169
      %s171 = smul.addr %s170, 8
      %s172 = scalar_lea.vmem %s0, %s171
      %p173 = pneg %p49
      %p174 = pneg %p46
      %p175 = pneg %p70
      %p176 = pneg %p67
      %p177 = pneg %p91
      %p178 = pneg %p88
      %p179 = pneg %p119
      %p180 = pneg %p116
      %s181 = smul.u32 32, %s19
      %p182 = scmp.lt.s32.totalorder %s18, 1
      %s183 = scalar_select %p182, %s18, 1
      %p184 = scmp.lt.s32.totalorder %s181, 31
      %s185 = scalar_select %p184, %s181, 31
      %s186 = smul.addr %s183, 32
      %s187 = sadd.s32 %s185, %s186
      %s188 = smul.addr %s187, 8
      %s189 = scalar_lea.vmem %s3, %s188
      %s190 = smul.u32 2, %s19
      %p191 = scmp.lt.s32.totalorder %s18, 1
      %s192 = scalar_select %p191, %s18, 1
      %p193 = scmp.lt.s32.totalorder %s190, 1
      %s194 = scalar_select %p193, %s190, 1
      %s195 = smul.addr %s192, 8
      %s196 = sadd.s32 %s194, %s195
      %s197 = smul.addr %s196, 8
      %s198 = scalar_lea.vmem %s0, %s197
      %s199 = smul.u32 2, %s19
      %s200 = smul.u32 32, %s19
      %p201 = scmp.lt.s32.totalorder %s18, 1
      %s202 = scalar_select %p201, %s18, 1
      %p203 = scmp.lt.s32.totalorder %s200, 31
      %s204 = scalar_select %p203, %s200, 31
      %s205 = smul.addr %s202, 32
      %s206 = sadd.s32 %s204, %s205
      %s207 = smul.addr %s206, 8
      %s208 = scalar_lea.vmem %s3, %s207
      %s209 = smul.u32 32, %s19
      %v210 = vld [vmem:[%s198] sm:$0xff]
      %v211 = vld [vmem:[%s198 + $0x8] sm:$0xff]
      %v212 = vld [vmem:[%s198 + $0x10] sm:$0xff]
      %v213 = vld [vmem:[%s198 + $0x18] sm:$0xff]
      %v214 = vld [vmem:[%s198 + $0x20] sm:$0xff]
      %v215 = vld [vmem:[%s198 + $0x28] sm:$0xff]
      %v216 = vld [vmem:[%s198 + $0x30] sm:$0xff]
      %v217 = vld [vmem:[%s198 + $0x38] sm:$0xff]
      %v218 = vld [vmem:[%s1] sm:$0xff]
      %v219 = vld [vmem:[%s1 + $0x8] sm:$0xff]
      %v220 = vld [vmem:[%s1 + $0x10] sm:$0xff]
      %v221 = vld [vmem:[%s1 + $0x18] sm:$0xff]
      %v222 = vld [vmem:[%s2] sm:$0x1]
      %v224 = vlaneseq
      %v225 = vshrl.u32 %v224, 7
      %v226 = vsub.s32 0, %v225
      %v227 = vrot.slane %v222, %v226
      %229 = vxpose.xlu0.b32.start [1/16] %v210, 128
      %230 = vxpose.xlu0.b32.cont [2/16] %v212, 128
      %231 = vxpose.xlu0.b32.cont [3/16] %v214, 128
      %232 = vxpose.xlu0.b32.cont [4/16] %v216, 128
      %233 = vxpose.xlu0.b32.cont [5/16] 0.0, 128
      %234 = vxpose.xlu0.b32.cont [6/16] 0.0, 128
      %235 = vxpose.xlu0.b32.cont [7/16] 0.0, 128
      %236 = vxpose.xlu0.b32.cont [8/16] 0.0, 128
      %237 = vxpose.xlu0.b32.cont [9/16] 0.0, 128
      %238 = vxpose.xlu0.b32.cont [10/16] 0.0, 128
      %239 = vxpose.xlu0.b32.cont [11/16] 0.0, 128
      %240 = vxpose.xlu0.b32.cont [12/16] 0.0, 128
      %241 = vxpose.xlu0.b32.cont [13/16] 0.0, 128
      %242 = vxpose.xlu0.b32.cont [14/16] 0.0, 128
      %243 = vxpose.xlu0.b32.cont [15/16] 0.0, 128
      %244 = vxpose.xlu0.b32.end [16/16] 0.0, 128
      %v245 = vpop.trf.xlu0
      %v246 = vpop.trf.xlu0
      %v247 = vpop.trf.xlu0
      %v248 = vpop.trf.xlu0
      %v249 = vpop.trf.xlu0
      %v250 = vpop.trf.xlu0
      %v251 = vpop.trf.xlu0
      %v252 = vpop.trf.xlu0
      %v253 = vpop.trf.xlu0
      %v254 = vpop.trf.xlu0
      %v255 = vpop.trf.xlu0
      %v256 = vpop.trf.xlu0
      %v257 = vpop.trf.xlu0
      %v258 = vpop.trf.xlu0
      %v259 = vpop.trf.xlu0
      %v260 = vpop.trf.xlu0
      %261 = vxpose.xlu0.b32.start [1/16] %v211, 128
      %262 = vxpose.xlu0.b32.cont [2/16] %v213, 128
      %263 = vxpose.xlu0.b32.cont [3/16] %v215, 128
      %264 = vxpose.xlu0.b32.cont [4/16] %v217, 128
      %265 = vxpose.xlu0.b32.cont [5/16] 0.0, 128
      %266 = vxpose.xlu0.b32.cont [6/16] 0.0, 128
      %267 = vxpose.xlu0.b32.cont [7/16] 0.0, 128
      %268 = vxpose.xlu0.b32.cont [8/16] 0.0, 128
      %269 = vxpose.xlu0.b32.cont [9/16] 0.0, 128
      %270 = vxpose.xlu0.b32.cont [10/16] 0.0, 128
      %271 = vxpose.xlu0.b32.cont [11/16] 0.0, 128
      %272 = vxpose.xlu0.b32.cont [12/16] 0.0, 128
      %273 = vxpose.xlu0.b32.cont [13/16] 0.0, 128
      %274 = vxpose.xlu0.b32.cont [14/16] 0.0, 128
      %275 = vxpose.xlu0.b32.cont [15/16] 0.0, 128
      %276 = vxpose.xlu0.b32.end [16/16] 0.0, 128
      %v277 = vpop.trf.xlu0
      %v278 = vpop.trf.xlu0
      %v279 = vpop.trf.xlu0
      %v280 = vpop.trf.xlu0
      %v281 = vpop.trf.xlu0
      %v282 = vpop.trf.xlu0
      %v283 = vpop.trf.xlu0
      %v284 = vpop.trf.xlu0
      %v285 = vpop.trf.xlu0
      %v286 = vpop.trf.xlu0
      %v287 = vpop.trf.xlu0
      %v288 = vpop.trf.xlu0
      %v289 = vpop.trf.xlu0
      %v290 = vpop.trf.xlu0
      %v291 = vpop.trf.xlu0
      %v292 = vpop.trf.xlu0
      %vm293 = vcmask 261120
      %v295 = vsel %vm293, %v245, 0
      %v298 = vsel %vm293, %v246, 0
      %v301 = vsel %vm293, %v247, 0
      %v304 = vsel %vm293, %v248, 0
      %v307 = vsel %vm293, %v249, 0
      %v310 = vsel %vm293, %v250, 0
      %v313 = vsel %vm293, %v251, 0
      %v316 = vsel %vm293, %v252, 0
      %v319 = vsel %vm293, %v253, 0
      %v322 = vsel %vm293, %v254, 0
      %v325 = vsel %vm293, %v255, 0
      %v328 = vsel %vm293, %v256, 0
      %v331 = vsel %vm293, %v257, 0
      %v334 = vsel %vm293, %v258, 0
      %v337 = vsel %vm293, %v259, 0
      %v340 = vsel %vm293, %v260, 0
      %v343 = vsel %vm293, %v277, 0
      %v346 = vsel %vm293, %v278, 0
      %v349 = vsel %vm293, %v279, 0
      %v352 = vsel %vm293, %v280, 0
      %v355 = vsel %vm293, %v281, 0
      %v358 = vsel %vm293, %v282, 0
      %v361 = vsel %vm293, %v283, 0
      %v364 = vsel %vm293, %v284, 0
      %v367 = vsel %vm293, %v285, 0
      %v370 = vsel %vm293, %v286, 0
      %v373 = vsel %vm293, %v287, 0
      %v376 = vsel %vm293, %v288, 0
      %v379 = vsel %vm293, %v289, 0
      %v382 = vsel %vm293, %v290, 0
      %v385 = vsel %vm293, %v291, 0
      %v388 = vsel %vm293, %v292, 0
      %390 = vmatprep.subr.mxu0 0.0
      %391 = vmatpush1.msra.mxu0 %v218
      %392 = vmatprep.subr.mxu0 0.0
      %393 = vmatpush1.msra.mxu0 %v219
      %394 = vmatprep.subr.mxu0 0.0
      %395 = vmatpush1.msra.mxu0 %v220
      %396 = vmatprep.subr.mxu0 0.0
      %397 = vmatpush1.msra.mxu0 %v221
      %398 = vmatprep.subr.mxu0 0.0
      %399 = vmatpush1.msra.mxu0 0.0
      %400 = vmatprep.subr.mxu0 0.0
      %401 = vmatpush1.msra.mxu0 0.0
      %402 = vmatprep.subr.mxu0 0.0
      %403 = vmatpush1.msra.mxu0 0.0
      %404 = vmatprep.subr.mxu0 0.0
      %405 = vmatpush1.msra.mxu0 0.0
      %406 = vmatprep.subr.mxu0 0.0
      %407 = vmatpush1.msra.mxu0 0.0
      %408 = vmatprep.subr.mxu0 0.0
      %409 = vmatpush1.msra.mxu0 0.0
      %410 = vmatprep.subr.mxu0 0.0
      %411 = vmatpush1.msra.mxu0 0.0
      %412 = vmatprep.subr.mxu0 0.0
      %413 = vmatpush1.msra.mxu0 0.0
      %414 = vmatprep.subr.mxu0 0.0
      %415 = vmatpush1.msra.mxu0 0.0
      %416 = vmatprep.subr.mxu0 0.0
      %417 = vmatpush1.msra.mxu0 0.0
      %418 = vmatprep.subr.mxu0 0.0
      %419 = vmatpush1.msra.mxu0 0.0
      %420 = vmatprep.subr.mxu0 0.0
      %421 = vmatpush1.msra.mxu0 0.0
      %422 = vmatprep.subr.mxu0 0.0
      %423 = vmatpush1.msra.mxu0 0.0
      %424 = vmatprep.subr.mxu0 0.0
      %425 = vmatpush1.msra.mxu0 0.0
      %426 = vmatprep.subr.mxu0 0.0
      %427 = vmatpush1.msra.mxu0 0.0
      %428 = vmatprep.subr.mxu0 0.0
      %429 = vmatpush1.msra.mxu0 0.0
      %430 = vmatprep.subr.mxu0 0.0
      %431 = vmatpush1.msra.mxu0 0.0
      %432 = vmatprep.subr.mxu0 0.0
      %433 = vmatpush1.msra.mxu0 0.0
      %434 = vmatprep.subr.mxu0 0.0
      %435 = vmatpush1.msra.mxu0 0.0
      %436 = vmatprep.subr.mxu0 0.0
      %437 = vmatpush1.msra.mxu0 0.0
      %438 = vmatprep.subr.mxu0 0.0
      %439 = vmatpush1.msra.mxu0 0.0
      %440 = vmatprep.subr.mxu0 0.0
      %441 = vmatpush1.msra.mxu0 0.0
      %442 = vmatprep.subr.mxu0 0.0
      %443 = vmatpush1.msra.mxu0 0.0
      %444 = vmatprep.subr.mxu0 0.0
      %445 = vmatpush1.msra.mxu0 0.0
      %446 = vmatprep.subr.mxu0 0.0
      %447 = vmatpush1.msra.mxu0 0.0
      %448 = vmatprep.subr.mxu0 0.0
      %449 = vmatpush1.msra.mxu0 0.0
      %450 = vmatprep.subr.mxu0 0.0
      %451 = vmatpush1.msra.mxu0 0.0
      %452 = vmatprep.subr.mxu0 0.0
      %453 = vmatpush1.msra.mxu0 0.0
      %454 = vmatprep.mubr.f32.mxu0 0.0
      %455 = vmatmul.mubr.f32.gmra.mrb[0].mxu0 %v295
      %v456 = vpop.f32.mrb[0].mxu0
      %v457 = vadd.f32 %v227, %v456
      %v458 = vpop.f32.mrb[0].mxu0
      %459 = vmatprep.mubr.f32.mxu0 0.0
      %460 = vmatmul.mubr.f32.gmra.mrb[0].mxu0 %v298
      %v461 = vpop.f32.mrb[0].mxu0
      %v462 = vadd.f32 %v227, %v461
      %v463 = vpop.f32.mrb[0].mxu0
      %464 = vmatprep.mubr.f32.mxu0 0.0
      %465 = vmatmul.mubr.f32.gmra.mrb[0].mxu0 %v301
      %v466 = vpop.f32.mrb[0].mxu0
      %v467 = vadd.f32 %v227, %v466
      %v468 = vpop.f32.mrb[0].mxu0
      %469 = vmatprep.mubr.f32.mxu0 0.0
      %470 = vmatmul.mubr.f32.gmra.mrb[0].mxu0 %v304
      %v471 = vpop.f32.mrb[0].mxu0
      %v472 = vadd.f32 %v227, %v471
      %v473 = vpop.f32.mrb[0].mxu0
      %474 = vmatprep.mubr.f32.mxu0 0.0
      %475 = vmatmul.mubr.f32.gmra.mrb[0].mxu0 %v307
      %v476 = vpop.f32.mrb[0].mxu0
      %v477 = vadd.f32 %v227, %v476
      %v478 = vpop.f32.mrb[0].mxu0
      %479 = vmatprep.mubr.f32.mxu0 0.0
      %480 = vmatmul.mubr.f32.gmra.mrb[0].mxu0 %v310
      %v481 = vpop.f32.mrb[0].mxu0
      %v482 = vadd.f32 %v227, %v481
      %v483 = vpop.f32.mrb[0].mxu0
      %484 = vmatprep.mubr.f32.mxu0 0.0
      %485 = vmatmul.mubr.f32.gmra.mrb[0].mxu0 %v313
      %v486 = vpop.f32.mrb[0].mxu0
      %v487 = vadd.f32 %v227, %v486
      %v488 = vpop.f32.mrb[0].mxu0
      %489 = vmatprep.mubr.f32.mxu0 0.0
      %490 = vmatmul.mubr.f32.gmra.mrb[0].mxu0 %v316
      %v491 = vpop.f32.mrb[0].mxu0
      %v492 = vadd.f32 %v227, %v491
      %v493 = vpop.f32.mrb[0].mxu0
      %494 = vmatprep.mubr.f32.mxu0 0.0
      %495 = vmatmul.mubr.f32.gmra.mrb[0].mxu0 %v319
      %v496 = vpop.f32.mrb[0].mxu0
      %v497 = vadd.f32 %v227, %v496
      %v498 = vpop.f32.mrb[0].mxu0
      %499 = vmatprep.mubr.f32.mxu0 0.0
      %500 = vmatmul.mubr.f32.gmra.mrb[0].mxu0 %v322
      %v501 = vpop.f32.mrb[0].mxu0
      %v502 = vadd.f32 %v227, %v501
      %v503 = vpop.f32.mrb[0].mxu0
      %504 = vmatprep.mubr.f32.mxu0 0.0
      %505 = vmatmul.mubr.f32.gmra.mrb[0].mxu0 %v325
      %v506 = vpop.f32.mrb[0].mxu0
      %v507 = vadd.f32 %v227, %v506
      %v508 = vpop.f32.mrb[0].mxu0
      %509 = vmatprep.mubr.f32.mxu0 0.0
      %510 = vmatmul.mubr.f32.gmra.mrb[0].mxu0 %v328
      %v511 = vpop.f32.mrb[0].mxu0
      %v512 = vadd.f32 %v227, %v511
      %v513 = vpop.f32.mrb[0].mxu0
      %514 = vmatprep.mubr.f32.mxu0 0.0
      %515 = vmatmul.mubr.f32.gmra.mrb[0].mxu0 %v331
      %v516 = vpop.f32.mrb[0].mxu0
      %v517 = vadd.f32 %v227, %v516
      %v518 = vpop.f32.mrb[0].mxu0
      %519 = vmatprep.mubr.f32.mxu0 0.0
      %520 = vmatmul.mubr.f32.gmra.mrb[0].mxu0 %v334
      %v521 = vpop.f32.mrb[0].mxu0
      %v522 = vadd.f32 %v227, %v521
      %v523 = vpop.f32.mrb[0].mxu0
      %524 = vmatprep.mubr.f32.mxu0 0.0
      %525 = vmatmul.mubr.f32.gmra.mrb[0].mxu0 %v337
      %v526 = vpop.f32.mrb[0].mxu0
      %v527 = vadd.f32 %v227, %v526
      %v528 = vpop.f32.mrb[0].mxu0
      %529 = vmatprep.mubr.f32.mxu0 0.0
      %530 = vmatmul.mubr.f32.gmra.mrb[0].mxu0 %v340
      %v531 = vpop.f32.mrb[0].mxu0
      %v532 = vadd.f32 %v227, %v531
      %v533 = vpop.f32.mrb[0].mxu0
      %534 = vmatprep.mubr.f32.mxu0 0.0
      %535 = vmatmul.mubr.f32.gmra.mrb[0].mxu0 %v343
      %v536 = vpop.f32.mrb[0].mxu0
      %v537 = vadd.f32 %v227, %v536
      %v538 = vpop.f32.mrb[0].mxu0
      %539 = vmatprep.mubr.f32.mxu0 0.0
      %540 = vmatmul.mubr.f32.gmra.mrb[0].mxu0 %v346
      %v541 = vpop.f32.mrb[0].mxu0
      %v542 = vadd.f32 %v227, %v541
      %v543 = vpop.f32.mrb[0].mxu0
      %544 = vmatprep.mubr.f32.mxu0 0.0
      %545 = vmatmul.mubr.f32.gmra.mrb[0].mxu0 %v349
      %v546 = vpop.f32.mrb[0].mxu0
      %v547 = vadd.f32 %v227, %v546
      %v548 = vpop.f32.mrb[0].mxu0
      %549 = vmatprep.mubr.f32.mxu0 0.0
      %550 = vmatmul.mubr.f32.gmra.mrb[0].mxu0 %v352
      %v551 = vpop.f32.mrb[0].mxu0
      %v552 = vadd.f32 %v227, %v551
      %v553 = vpop.f32.mrb[0].mxu0
      %554 = vmatprep.mubr.f32.mxu0 0.0
      %555 = vmatmul.mubr.f32.gmra.mrb[0].mxu0 %v355
      %v556 = vpop.f32.mrb[0].mxu0
      %v557 = vadd.f32 %v227, %v556
      %v558 = vpop.f32.mrb[0].mxu0
      %559 = vmatprep.mubr.f32.mxu0 0.0
      %560 = vmatmul.mubr.f32.gmra.mrb[0].mxu0 %v358
      %v561 = vpop.f32.mrb[0].mxu0
      %v562 = vadd.f32 %v227, %v561
      %v563 = vpop.f32.mrb[0].mxu0
      %564 = vmatprep.mubr.f32.mxu0 0.0
      %565 = vmatmul.mubr.f32.gmra.mrb[0].mxu0 %v361
      %v566 = vpop.f32.mrb[0].mxu0
      %v567 = vadd.f32 %v227, %v566
      %v568 = vpop.f32.mrb[0].mxu0
      %569 = vmatprep.mubr.f32.mxu0 0.0
      %570 = vmatmul.mubr.f32.gmra.mrb[0].mxu0 %v364
      %v571 = vpop.f32.mrb[0].mxu0
      %v572 = vadd.f32 %v227, %v571
      %v573 = vpop.f32.mrb[0].mxu0
      %574 = vmatprep.mubr.f32.mxu0 0.0
      %575 = vmatmul.mubr.f32.gmra.mrb[0].mxu0 %v367
      %v576 = vpop.f32.mrb[0].mxu0
      %v577 = vadd.f32 %v227, %v576
      %v578 = vpop.f32.mrb[0].mxu0
      %579 = vmatprep.mubr.f32.mxu0 0.0
      %580 = vmatmul.mubr.f32.gmra.mrb[0].mxu0 %v370
      %v581 = vpop.f32.mrb[0].mxu0
      %v582 = vadd.f32 %v227, %v581
      %v583 = vpop.f32.mrb[0].mxu0
      %584 = vmatprep.mubr.f32.mxu0 0.0
      %585 = vmatmul.mubr.f32.gmra.mrb[0].mxu0 %v373
      %v586 = vpop.f32.mrb[0].mxu0
      %v587 = vadd.f32 %v227, %v586
      %v588 = vpop.f32.mrb[0].mxu0
      %589 = vmatprep.mubr.f32.mxu0 0.0
      %590 = vmatmul.mubr.f32.gmra.mrb[0].mxu0 %v376
      %v591 = vpop.f32.mrb[0].mxu0
      %v592 = vadd.f32 %v227, %v591
      %v593 = vpop.f32.mrb[0].mxu0
      %594 = vmatprep.mubr.f32.mxu0 0.0
      %595 = vmatmul.mubr.f32.gmra.mrb[0].mxu0 %v379
      %v596 = vpop.f32.mrb[0].mxu0
      %v597 = vadd.f32 %v227, %v596
      %v598 = vpop.f32.mrb[0].mxu0
      %599 = vmatprep.mubr.f32.mxu0 0.0
      %600 = vmatmul.mubr.f32.gmra.mrb[0].mxu0 %v382
      %v601 = vpop.f32.mrb[0].mxu0
      %v602 = vadd.f32 %v227, %v601
      %v603 = vpop.f32.mrb[0].mxu0
      %604 = vmatprep.mubr.f32.mxu0 0.0
      %605 = vmatmul.mubr.f32.gmra.mrb[0].mxu0 %v385
      %v606 = vpop.f32.mrb[0].mxu0
      %v607 = vadd.f32 %v227, %v606
      %v608 = vpop.f32.mrb[0].mxu0
      %609 = vmatprep.mubr.f32.mxu0 0.0
      %610 = vmatmul.mubr.f32.gmra.mrb[0].mxu0 %v388
      %v611 = vpop.f32.mrb[0].mxu0
      %v612 = vadd.f32 %v227, %v611
      %v613 = vpop.f32.mrb[0].mxu0
      %614 = vdwg.mxu0
      %vm615 = vcmask 523264
      %616 = vst.msk [vmem:[%s208] sm:$0xff] %vm615, %v457
      %617 = vst.msk [vmem:[%s208 + $0x8] sm:$0xff] %vm615, %v462
      %618 = vst.msk [vmem:[%s208 + $0x10] sm:$0xff] %vm615, %v467
      %619 = vst.msk [vmem:[%s208 + $0x18] sm:$0xff] %vm615, %v472
      %620 = vst.msk [vmem:[%s208 + $0x20] sm:$0xff] %vm615, %v477
      %621 = vst.msk [vmem:[%s208 + $0x28] sm:$0xff] %vm615, %v482
      %622 = vst.msk [vmem:[%s208 + $0x30] sm:$0xff] %vm615, %v487
      %623 = vst.msk [vmem:[%s208 + $0x38] sm:$0xff] %vm615, %v492
      %624 = vst.msk [vmem:[%s208 + $0x40] sm:$0xff] %vm615, %v497
      %625 = vst.msk [vmem:[%s208 + $0x48] sm:$0xff] %vm615, %v502
      %626 = vst.msk [vmem:[%s208 + $0x50] sm:$0xff] %vm615, %v507
      %627 = vst.msk [vmem:[%s208 + $0x58] sm:$0xff] %vm615, %v512
      %628 = vst.msk [vmem:[%s208 + $0x60] sm:$0xff] %vm615, %v517
      %629 = vst.msk [vmem:[%s208 + $0x68] sm:$0xff] %vm615, %v522
      %630 = vst.msk [vmem:[%s208 + $0x70] sm:$0xff] %vm615, %v527
      %631 = vst.msk [vmem:[%s208 + $0x78] sm:$0xff] %vm615, %v532
      %632 = vst.msk [vmem:[%s208 + $0x80] sm:$0xff] %vm615, %v537
      %633 = vst.msk [vmem:[%s208 + $0x88] sm:$0xff] %vm615, %v542
      %634 = vst.msk [vmem:[%s208 + $0x90] sm:$0xff] %vm615, %v547
      %635 = vst.msk [vmem:[%s208 + $0x98] sm:$0xff] %vm615, %v552
      %636 = vst.msk [vmem:[%s208 + $0xa0] sm:$0xff] %vm615, %v557
      %637 = vst.msk [vmem:[%s208 + $0xa8] sm:$0xff] %vm615, %v562
      %638 = vst.msk [vmem:[%s208 + $0xb0] sm:$0xff] %vm615, %v567
      %639 = vst.msk [vmem:[%s208 + $0xb8] sm:$0xff] %vm615, %v572
      %640 = vst.msk [vmem:[%s208 + $0xc0] sm:$0xff] %vm615, %v577
      %641 = vst.msk [vmem:[%s208 + $0xc8] sm:$0xff] %vm615, %v582
      %642 = vst.msk [vmem:[%s208 + $0xd0] sm:$0xff] %vm615, %v587
      %643 = vst.msk [vmem:[%s208 + $0xd8] sm:$0xff] %vm615, %v592
      %644 = vst.msk [vmem:[%s208 + $0xe0] sm:$0xff] %vm615, %v597
      %645 = vst.msk [vmem:[%s208 + $0xe8] sm:$0xff] %vm615, %v602
      %646 = vst.msk [vmem:[%s208 + $0xf0] sm:$0xff] %vm615, %v607
      %647 = vst.msk [vmem:[%s208 + $0xf8] sm:$0xff] %vm615, %v612
      %s648 = smul.u32 32, %s19
      %p649 = scmp.lt.s32.totalorder %s18, 1
      %s650 = scalar_select %p649, %s18, 1
      %p651 = scmp.lt.s32.totalorder %s648, 31
      %s652 = scalar_select %p651, %s648, 31
      %s653 = smul.addr %s650, 32
      %s654 = sadd.s32 %s652, %s653
      %s655 = smul.addr %s654, 8
      %s656 = scalar_lea.vmem %s3, %s655
      // Predicated region
      $region33: #{mlp_forward.1} parent=31 // pred_check
        %p657 = pneg %p116
      $region34: #{mlp_forward.1} parent=31 // pred_check_branch
        %659 = sbr.rel (%p657) target = $region36
      $region35: #{mlp_forward.1} parent=31 // pred_region
        %s660 = smul.u32 32, %s19
      $region36: #{mlp_forward.1} parent=31 // pred_fallthru
        _
    $region32: #{mlp_forward.1} parent=5 // pred_fallthru
      _
    %p661 = scmp.le.s32.totalorder 2, %s9
    // Predicated region
    $region37: #{mlp_forward.1} parent=5 // pred_check
      %p662 = pneg %p661
    $region38: #{mlp_forward.1} parent=5 // pred_check_branch
      %664 = sbr.rel (%p662) target = $region40
    $region39: #{mlp_forward.1} parent=5 // pred_region
      %s665 = ssub.s32 %s9, 2
      // Predicated region
      $region41: #{mlp_forward.1} parent=39 // pred_check
        %p666 = pneg %p122
      $region42: #{mlp_forward.1} parent=39 // pred_check_branch
        %668 = sbr.rel (%p666) target = $region44
      $region43: #{mlp_forward.1} parent=39 // pred_region
        %s669 = smul.u32 32, %s21
        %p670 = scmp.lt.s32.totalorder %s20, 1
        %s671 = scalar_select %p670, %s20, 1
        %p672 = scmp.lt.s32.totalorder %s669, 31
        %s673 = scalar_select %p672, %s669, 31
        %s674 = smul.addr %s671, 32
        %s675 = sadd.s32 %s673, %s674
        %s676 = smul.addr %s675, 8
        %s677 = scalar_lea.vmem %s3, %s676
      $region44: #{mlp_forward.1} parent=39 // pred_fallthru
        _
    $region40: #{mlp_forward.1} parent=5 // pred_fallthru
      _
  $region6: #{mlp_forward.1} parent=0 // loop_footer
    %s13 = sadd.s32 1, %s9
  $region7: #{mlp_forward.1} parent=0 // loop_footer_branch
    %8 = sbr.rel target = $region3
  $region8: #{mlp_forward.1} parent=0 // loop_exit
    _

</llo_original>
